<compile_context>
chip_gen: v7x
topology: tpu7x:2x2x1
jax: 0.10.0
libtpu: 0.0.40
codegen_flags: <defaults>
</compile_context>

<pallas_src>
import jax
import jax.numpy as jnp
from jax.experimental import pallas as pl
from jax.experimental.pallas import tpu as pltpu


def _round_up(x: int, m: int) -> int:
    return (x + m - 1) // m * m


def _pad_rows(x, n_pad):
    n = x.shape[0]
    if n == n_pad:
        return x
    pad = [(0, n_pad - n)] + [(0, 0)] * (x.ndim - 1)
    return jnp.pad(x, pad)


def _dann_loss_kernel(f_s_ref, f_t_ref, ws_ref, w1_ref, b1_ref, w2_ref, b2_ref,
                      v_ref, nt_ref, db_ref, out_ref):
    i = pl.program_id(0)
    tile_n = f_s_ref.shape[0]

    # Loss accumulator lives in the resident (1,1) output block.
    @pl.when(i == 0)
    def _():
        out_ref[...] = jnp.zeros_like(out_ref)

    w1 = w1_ref[...]
    b1 = b1_ref[...]
    w2 = w2_ref[...]
    b2 = b2_ref[...]
    v = v_ref[...]
    db = db_ref[0]

    def margin(x):
        # Domain discriminator D -> H -> H (MXU, f32 accumulation, f32 ReLU),
        # then the 2-class logit margin z = logits[:,1] - logits[:,0] computed
        # as a VPU multiply + lane reduce (no 2-lane-wide MXU pop).
        h1 = jnp.maximum(
            jnp.dot(x, w1, preferred_element_type=jnp.float32) + b1, 0.0)
        h2 = jnp.maximum(
            jnp.dot(h1.astype(w2.dtype), w2,
                    preferred_element_type=jnp.float32) + b2, 0.0)
        return jnp.sum(h2 * v, axis=-1, keepdims=True) + db          # (T, 1)

    z_s = margin(f_s_ref[...])
    z_t = margin(f_t_ref[...])

    def softplus(x):  # numerically stable; exp/log run on the EUP
        return jnp.maximum(x, 0.0) + jnp.log(1.0 + jnp.exp(-jnp.abs(x)))

    # Source rows: label 1 -> CE = softplus(-z). Padded source rows have w_s == 0.
    loss_s = softplus(-z_s) * ws_ref[...]
    # Target rows: label 0 -> CE = softplus(z). Mask padded rows (row >= n_t).
    row = i * tile_n + jax.lax.broadcasted_iota(jnp.int32, (tile_n, 1), 0)
    loss_t = softplus(z_t) * (row < nt_ref[0]).astype(jnp.float32)

    out_ref[...] += jnp.sum(loss_s + loss_t, keepdims=True)


def domain_adversarial_loss(f_s, f_t, params, w_s=None, *,
                            tile_n: int = 256, use_bf16: bool = True):
    """Forward pass of DomainAdversarialLoss (sigmoid=False, reduction='mean').

    Matches F.cross_entropy(d, labels, reduction='none') * cat([w_s, w_t]) -> .mean()
    over the concatenated source+target batch.  The GRL is identity forward.
    """
    n_s, d = f_s.shape
    n_t, d_t = f_t.shape
    assert d == d_t, "source/target feature dims must match"
    w1, b1, w2, b2, w3, b3 = params
    h = w1.shape[1]

    if w_s is None:
        w_s = jnp.ones((n_s,), jnp.float32)
    w_s = w_s.astype(jnp.float32).reshape(n_s, 1)

    # Row tiling: pad both domains to a common tile-aligned length.
    # tile_n defaults to 256 (MXU aligned, multiple of 128 for v5e); for demo
    # sized inputs it clamps to one multiple-of-8 tile.  With the default tile
    # the double-buffered bf16 f tiles + resident weights stay well under the
    # ~32 MiB scoped VMEM budget (safe on v7x's smaller 64 MiB VMEM).
    n_max = max(n_s, n_t)
    tile_n = min(tile_n, _round_up(n_max, 8))
    n_pad = _round_up(n_max, tile_n)
    grid = (n_pad // tile_n,)

    mxu_dtype = jnp.bfloat16 if use_bf16 else jnp.float32
    f_s_p = _pad_rows(f_s.astype(mxu_dtype), n_pad)
    f_t_p = _pad_rows(f_t.astype(mxu_dtype), n_pad)
    ws_p = _pad_rows(w_s, n_pad)                      # zero weight on padded rows

    w1c = w1.astype(mxu_dtype)
    w2c = w2.astype(mxu_dtype)
    b1r = b1.astype(jnp.float32).reshape(1, h)
    b2r = b2.astype(jnp.float32).reshape(1, h)
    v = (w3[:, 1] - w3[:, 0]).astype(jnp.float32).reshape(1, h)
    db = (b3[1] - b3[0]).astype(jnp.float32).reshape(1)
    nt = jnp.array([n_t], jnp.int32)

    tiled = lambda bs: pl.BlockSpec(bs, lambda i: (i, 0))
    resident = lambda bs: pl.BlockSpec(bs, lambda i: (0, 0))
    smem = pl.BlockSpec(memory_space=pltpu.MemorySpace.SMEM)

    total = pl.pallas_call(
        _dann_loss_kernel,
        out_shape=jax.ShapeDtypeStruct((1, 1), jnp.float32),
        grid=grid,
        in_specs=[
            tiled((tile_n, d)),       # f_s tile (streamed, double-buffered)
            tiled((tile_n, d)),       # f_t tile (streamed, double-buffered)
            tiled((tile_n, 1)),       # w_s tile
            resident((d, h)),         # w1 (resident)
            resident((1, h)),         # b1
            resident((h, h)),         # w2 (resident)
            resident((1, h)),         # b2
            resident((1, h)),         # v = w3[:,1] - w3[:,0]
            smem,                     # n_t scalar
            smem,                     # db = b3[1] - b3[0]
        ],
        out_specs=pl.BlockSpec((1, 1), lambda i: (0, 0)),
        compiler_params=pltpu.CompilerParams(
            dimension_semantics=("arbitrary",),   # row axis is a reduction
        ),
    )(f_s_p, f_t_p, ws_p, w1c, b1r, w2c, b2r, v, nt, db)

    # TODO(synk): sigmoid=True branch (per-domain BCE on a 1-logit head) and
    # reduction='sum'/'none' are not implemented; default path only.
    # NOTE: on v7x a leading size-2 "parallel" grid axis over row halves would
    # let both TensorCores reduce partial sums; omitted here for simplicity.

    # reduction='mean' over the full concatenated batch (multiply, not divide).
    return total[0, 0] * (1.0 / (n_s + n_t))


def _reference(f_s, f_t, params, w_s=None, use_bf16=True):
    """Pure-JAX reference mirroring the PyTorch forward (log-softmax CE path)."""
    w1, b1, w2, b2, w3, b3 = params
    dt = jnp.bfloat16 if use_bf16 else jnp.float32
    f = jnp.concatenate([f_s, f_t], axis=0)
    h1 = jnp.maximum(
        jnp.dot(f.astype(dt), w1.astype(dt),
                preferred_element_type=jnp.float32) + b1, 0.0)
    h2 = jnp.maximum(
        jnp.dot(h1.astype(dt), w2.astype(dt),
                preferred_element_type=jnp.float32) + b2, 0.0)
    logits = jnp.dot(h2, w3, precision=jax.lax.Precision.HIGHEST) + b3
    labels = jnp.concatenate([jnp.ones((f_s.shape[0],), jnp.int32),
                              jnp.zeros((f_t.shape[0],), jnp.int32)])
    logp = jax.nn.log_softmax(logits, axis=-1)
    ce = -jnp.take_along_axis(logp, labels[:, None], axis=1)[:, 0]
    if w_s is None:
        w_s = jnp.ones((f_s.shape[0],), jnp.float32)
    w = jnp.concatenate([w_s.reshape(-1),
                         jnp.ones((f_t.shape[0],), jnp.float32)])
    return (ce * w).mean()


if __name__ == "__main__":
    D, H = 128, 128            # feature dim / discriminator hidden dim (lane aligned)
    B_S, B_T = 28, 20          # unequal batches -> exercises padding + masking

    key = jax.random.PRNGKey(0)
    k_fs, k_ft, k1, k2, k3, kw = jax.random.split(key, 6)

    f_s = jax.random.normal(k_fs, (B_S, D), jnp.float32)
    f_t = jax.random.normal(k_ft, (B_T, D), jnp.float32)

    # Domain discriminator MLP D -> H -> H -> 2.
    w1 = jax.random.normal(k1, (D, H), jnp.float32) * 0.1
    b1 = jnp.zeros((H,), jnp.float32)
    w2 = jax.random.normal(k2, (H, H), jnp.float32) * 0.1
    b2 = jnp.zeros((H,), jnp.float32)
    w3 = jax.random.normal(k3, (H, 2), jnp.float32) * 0.1
    b3 = jnp.zeros((2,), jnp.float32)
    params = (w1, b1, w2, b2, w3, b3)

    # Default path: w_s = None (all-ones).  Small tile -> multi-step grid.
    loss = domain_adversarial_loss(f_s, f_t, params, tile_n=16)
    jax.block_until_ready(loss)
    ref = _reference(f_s, f_t, params)
    assert jnp.allclose(loss, ref, rtol=1e-3, atol=1e-5), (loss, ref)

    # Weighted source samples.
    w_s = jax.random.uniform(kw, (B_S,), jnp.float32, minval=0.5, maxval=1.5)
    loss_w = domain_adversarial_loss(f_s, f_t, params, w_s=w_s, tile_n=16)
    jax.block_until_ready(loss_w)
    ref_w = _reference(f_s, f_t, params, w_s=w_s)
    assert jnp.allclose(loss_w, ref_w, rtol=1e-3, atol=1e-5), (loss_w, ref_w)

    print("KERNEL_OK")
</pallas_src>

<mosaic_0001>
module attributes {stable_mosaic.version = 11 : i64} {
  func.func @_dann_loss_kernel(%arg0: i32, %arg1: memref<16x128xbf16, #tpu.memory_space<vmem>>, %arg2: memref<16x128xbf16, #tpu.memory_space<vmem>>, %arg3: memref<16x1xf32, #tpu.memory_space<vmem>>, %arg4: memref<128x128xbf16, #tpu.memory_space<vmem>>, %arg5: memref<1x128xf32, #tpu.memory_space<vmem>>, %arg6: memref<128x128xbf16, #tpu.memory_space<vmem>>, %arg7: memref<1x128xf32, #tpu.memory_space<vmem>>, %arg8: memref<1x128xf32, #tpu.memory_space<vmem>>, %arg9: memref<1xi32, #tpu.memory_space<smem>>, %arg10: memref<1xf32, #tpu.memory_space<smem>>, %arg11: memref<1x1xf32, #tpu.memory_space<vmem>>) attributes {dimension_semantics = [#tpu.dimension_semantics<arbitrary>], iteration_bounds = array<i64: 2>, scalar_prefetch = 0 : i64, scratch_operands = 0 : i64, tpu.core_type = #tpu.core_type<tc>, window_params = [{transform_indices = @transform_0, window_bounds = array<i64: 16, 128>}, {transform_indices = @transform_1, window_bounds = array<i64: 16, 128>}, {transform_indices = @transform_2, window_bounds = array<i64: 16, 1>}, {pipeline_mode = #tpu.pipeline_mode<synchronous>, transform_indices = @transform_3, window_bounds = array<i64: 128, 128>}, {pipeline_mode = #tpu.pipeline_mode<synchronous>, transform_indices = @transform_4, window_bounds = array<i64: 1, 128>}, {pipeline_mode = #tpu.pipeline_mode<synchronous>, transform_indices = @transform_5, window_bounds = array<i64: 128, 128>}, {pipeline_mode = #tpu.pipeline_mode<synchronous>, transform_indices = @transform_6, window_bounds = array<i64: 1, 128>}, {pipeline_mode = #tpu.pipeline_mode<synchronous>, transform_indices = @transform_7, window_bounds = array<i64: 1, 128>}, {transform_indices = @transform_8, window_bounds = array<i64: 1>}, {transform_indices = @transform_9, window_bounds = array<i64: 1>}, {pipeline_mode = #tpu.pipeline_mode<synchronous>, transform_indices = @transform_10, window_bounds = array<i64: 1, 1>}]} {
    %c0_i32 = arith.constant 0 : i32
    %0 = arith.cmpi eq, %arg0, %c0_i32 : i32
    %1 = arith.extui %0 : i1 to i32
    %c0_i32_0 = arith.constant 0 : i32
    %2 = arith.cmpi ne, %1, %c0_i32_0 : i32
    scf.if %2 {
      %cst_39 = arith.constant 0.000000e+00 : f32
      %88 = vector.broadcast %cst_39 : f32 to vector<1x1xf32>
      %c0_40 = arith.constant 0 : index
      %c0_41 = arith.constant 0 : index
      %89 = vector.load %arg11[%c0_40, %c0_41] : memref<1x1xf32, #tpu.memory_space<vmem>>, vector<1x1xf32>
      tpu.vector_store %arg11[%c0_40, %c0_41], %88 {strides = array<i32>} : memref<1x1xf32, #tpu.memory_space<vmem>>, vector<1x1xf32>,
    } else {
    }
    %c0 = arith.constant 0 : index
    %c0_1 = arith.constant 0 : index
    %3 = vector.load %arg4[%c0, %c0_1] : memref<128x128xbf16, #tpu.memory_space<vmem>>, vector<128x128xbf16>
    %c0_2 = arith.constant 0 : index
    %c0_3 = arith.constant 0 : index
    %4 = vector.load %arg5[%c0_2, %c0_3] : memref<1x128xf32, #tpu.memory_space<vmem>>, vector<1x128xf32>
    %c0_4 = arith.constant 0 : index
    %c0_5 = arith.constant 0 : index
    %5 = vector.load %arg6[%c0_4, %c0_5] : memref<128x128xbf16, #tpu.memory_space<vmem>>, vector<128x128xbf16>
    %c0_6 = arith.constant 0 : index
    %c0_7 = arith.constant 0 : index
    %6 = vector.load %arg7[%c0_6, %c0_7] : memref<1x128xf32, #tpu.memory_space<vmem>>, vector<1x128xf32>
    %c0_8 = arith.constant 0 : index
    %c0_9 = arith.constant 0 : index
    %7 = vector.load %arg8[%c0_8, %c0_9] : memref<1x128xf32, #tpu.memory_space<vmem>>, vector<1x128xf32>
    %c0_10 = arith.constant 0 : index
    %8 = memref.load %arg10[%c0_10] : memref<1xf32, #tpu.memory_space<smem>>
    %c0_11 = arith.constant 0 : index
    %c0_12 = arith.constant 0 : index
    %9 = vector.load %arg1[%c0_11, %c0_12] : memref<16x128xbf16, #tpu.memory_space<vmem>>, vector<16x128xbf16>
    %cst = arith.constant dense<0.000000e+00> : vector<16x128xf32>
    %10 = tpu.matmul %9, %3, %cst {dimension_numbers = #tpu.dot_dimension_numbers<[1], [0], [0], [1], [0, 0, 1, 1], [], []>} : vector<16x128xbf16>, vector<128x128xbf16>, vector<16x128xf32> -> vector<16x128xf32>
    %11 = vector.broadcast %4 : vector<1x128xf32> to vector<16x128xf32>
    %12 = arith.addf %10, %11 : vector<16x128xf32>
    %cst_13 = arith.constant 0.000000e+00 : f32
    %13 = vector.broadcast %cst_13 : f32 to vector<16x128xf32>
    %14 = arith.maximumf %12, %13 : vector<16x128xf32>
    %15 = arith.truncf %14 : vector<16x128xf32> to vector<16x128xbf16>
    %cst_14 = arith.constant dense<0.000000e+00> : vector<16x128xf32>
    %16 = tpu.matmul %15, %5, %cst_14 {dimension_numbers = #tpu.dot_dimension_numbers<[1], [0], [0], [1], [0, 0, 1, 1], [], []>} : vector<16x128xbf16>, vector<128x128xbf16>, vector<16x128xf32> -> vector<16x128xf32>
    %17 = vector.broadcast %6 : vector<1x128xf32> to vector<16x128xf32>
    %18 = arith.addf %16, %17 : vector<16x128xf32>
    %cst_15 = arith.constant 0.000000e+00 : f32
    %19 = vector.broadcast %cst_15 : f32 to vector<16x128xf32>
    %20 = arith.maximumf %18, %19 : vector<16x128xf32>
    %21 = vector.broadcast %7 : vector<1x128xf32> to vector<16x128xf32>
    %22 = arith.mulf %20, %21 : vector<16x128xf32>
    %cst_16 = arith.constant dense<0.000000e+00> : vector<16xf32>
    %23 = vector.multi_reduction <add>, %22, %cst_16 [1] : vector<16x128xf32> to vector<16xf32>
    %24 = vector.shape_cast %23 : vector<16xf32> to vector<16x1xf32>
    %25 = vector.broadcast %8 : f32 to vector<16x1xf32>
    %26 = arith.addf %24, %25 : vector<16x1xf32>
    %c0_17 = arith.constant 0 : index
    %c0_18 = arith.constant 0 : index
    %27 = vector.load %arg2[%c0_17, %c0_18] : memref<16x128xbf16, #tpu.memory_space<vmem>>, vector<16x128xbf16>
    %cst_19 = arith.constant dense<0.000000e+00> : vector<16x128xf32>
    %28 = tpu.matmul %27, %3, %cst_19 {dimension_numbers = #tpu.dot_dimension_numbers<[1], [0], [0], [1], [0, 0, 1, 1], [], []>} : vector<16x128xbf16>, vector<128x128xbf16>, vector<16x128xf32> -> vector<16x128xf32>
    %29 = vector.broadcast %4 : vector<1x128xf32> to vector<16x128xf32>
    %30 = arith.addf %28, %29 : vector<16x128xf32>
    %cst_20 = arith.constant 0.000000e+00 : f32
    %31 = vector.broadcast %cst_20 : f32 to vector<16x128xf32>
    %32 = arith.maximumf %30, %31 : vector<16x128xf32>
    %33 = arith.truncf %32 : vector<16x128xf32> to vector<16x128xbf16>
    %cst_21 = arith.constant dense<0.000000e+00> : vector<16x128xf32>
    %34 = tpu.matmul %33, %5, %cst_21 {dimension_numbers = #tpu.dot_dimension_numbers<[1], [0], [0], [1], [0, 0, 1, 1], [], []>} : vector<16x128xbf16>, vector<128x128xbf16>, vector<16x128xf32> -> vector<16x128xf32>
    %35 = vector.broadcast %6 : vector<1x128xf32> to vector<16x128xf32>
    %36 = arith.addf %34, %35 : vector<16x128xf32>
    %cst_22 = arith.constant 0.000000e+00 : f32
    %37 = vector.broadcast %cst_22 : f32 to vector<16x128xf32>
    %38 = arith.maximumf %36, %37 : vector<16x128xf32>
    %39 = vector.broadcast %7 : vector<1x128xf32> to vector<16x128xf32>
    %40 = arith.mulf %38, %39 : vector<16x128xf32>
    %cst_23 = arith.constant dense<0.000000e+00> : vector<16xf32>
    %41 = vector.multi_reduction <add>, %40, %cst_23 [1] : vector<16x128xf32> to vector<16xf32>
    %42 = vector.shape_cast %41 : vector<16xf32> to vector<16x1xf32>
    %43 = vector.broadcast %8 : f32 to vector<16x1xf32>
    %44 = arith.addf %42, %43 : vector<16x1xf32>
    %cst_24 = arith.constant 0.000000e+00 : f32
    %45 = vector.broadcast %cst_24 : f32 to vector<16x1xf32>
    %46 = arith.subf %45, %26 : vector<16x1xf32>
    %cst_25 = arith.constant 0.000000e+00 : f32
    %47 = vector.broadcast %cst_25 : f32 to vector<16x1xf32>
    %48 = arith.maximumf %46, %47 : vector<16x1xf32>
    %49 = math.absf %46 : vector<16x1xf32>
    %cst_26 = arith.constant 0.000000e+00 : f32
    %50 = vector.broadcast %cst_26 : f32 to vector<16x1xf32>
    %51 = arith.subf %50, %49 : vector<16x1xf32>
    %52 = math.exp %51 : vector<16x1xf32>
    %cst_27 = arith.constant 1.000000e+00 : f32
    %53 = vector.broadcast %cst_27 : f32 to vector<16x1xf32>
    %54 = arith.addf %53, %52 : vector<16x1xf32>
    %55 = math.log %54 : vector<16x1xf32>
    %56 = arith.addf %48, %55 : vector<16x1xf32>
    %c0_28 = arith.constant 0 : index
    %c0_29 = arith.constant 0 : index
    %57 = vector.load %arg3[%c0_28, %c0_29] : memref<16x1xf32, #tpu.memory_space<vmem>>, vector<16x1xf32>
    %58 = arith.mulf %56, %57 : vector<16x1xf32>
    %c16_i32 = arith.constant 16 : i32
    %59 = arith.muli %arg0, %c16_i32 : i32
    %60 = tpu.iota {dimensions = array<i32: 0>} : vector<16x1xi32>
    %61 = vector.broadcast %59 : i32 to vector<16x1xi32>
    %62 = arith.addi %61, %60 : vector<16x1xi32>
    %cst_30 = arith.constant 0.000000e+00 : f32
    %63 = vector.broadcast %cst_30 : f32 to vector<16x1xf32>
    %64 = arith.maximumf %44, %63 : vector<16x1xf32>
    %65 = math.absf %44 : vector<16x1xf32>
    %cst_31 = arith.constant 0.000000e+00 : f32
    %66 = vector.broadcast %cst_31 : f32 to vector<16x1xf32>
    %67 = arith.subf %66, %65 : vector<16x1xf32>
    %68 = math.exp %67 : vector<16x1xf32>
    %cst_32 = arith.constant 1.000000e+00 : f32
    %69 = vector.broadcast %cst_32 : f32 to vector<16x1xf32>
    %70 = arith.addf %69, %68 : vector<16x1xf32>
    %71 = math.log %70 : vector<16x1xf32>
    %72 = arith.addf %64, %71 : vector<16x1xf32>
    %c0_33 = arith.constant 0 : index
    %73 = memref.load %arg9[%c0_33] : memref<1xi32, #tpu.memory_space<smem>>
    %74 = vector.broadcast %73 : i32 to vector<16x1xi32>
    %75 = arith.cmpi slt, %62, %74 : vector<16x1xi32>
    %76 = arith.extui %75 : vector<16x1xi1> to vector<16x1xi32>
    %77 = arith.sitofp %76 : vector<16x1xi32> to vector<16x1xf32>
    %78 = arith.mulf %72, %77 : vector<16x1xf32>
    %c0_34 = arith.constant 0 : index
    %c0_35 = arith.constant 0 : index
    %79 = vector.load %arg11[%c0_34, %c0_35] : memref<1x1xf32, #tpu.memory_space<vmem>>, vector<1x1xf32>
    %80 = arith.addf %58, %78 : vector<16x1xf32>
    %81 = vector.shape_cast %80 : vector<16x1xf32> to vector<1x16x1xf32>
    %cst_36 = arith.constant dense<0.000000e+00> : vector<1xf32>
    %82 = vector.multi_reduction <add>, %81, %cst_36 [1, 2] : vector<1x16x1xf32> to vector<1xf32>
    %83 = vector.shape_cast %82 : vector<1xf32> to vector<1x1x1xf32>
    %84 = vector.extract %83[0, 0, 0] : f32 from vector<1x1x1xf32>
    %85 = vector.broadcast %84 : f32 to vector<1x1xf32>
    %86 = arith.addf %79, %85 : vector<1x1xf32>
    %c0_37 = arith.constant 0 : index
    %c0_38 = arith.constant 0 : index
    %87 = vector.load %arg11[%c0_37, %c0_38] : memref<1x1xf32, #tpu.memory_space<vmem>>, vector<1x1xf32>
    tpu.vector_store %arg11[%c0_37, %c0_38], %86 {strides = array<i32>} : memref<1x1xf32, #tpu.memory_space<vmem>>, vector<1x1xf32>,
    return
  }
  func.func @transform_0(%arg0: i32) -> (i32, i32) {
    %c0_i32 = arith.constant 0 : i32
    %c0_i32_0 = arith.constant 0 : i32
    return %arg0, %c0_i32 : i32, i32
  }
  func.func @transform_1(%arg0: i32) -> (i32, i32) {
    %c0_i32 = arith.constant 0 : i32
    %c0_i32_0 = arith.constant 0 : i32
    return %arg0, %c0_i32 : i32, i32
  }
  func.func @transform_2(%arg0: i32) -> (i32, i32) {
    %c0_i32 = arith.constant 0 : i32
    %c0_i32_0 = arith.constant 0 : i32
    return %arg0, %c0_i32 : i32, i32
  }
  func.func @transform_3(%arg0: i32) -> (i32, i32) {
    %c0_i32 = arith.constant 0 : i32
    %c0_i32_0 = arith.constant 0 : i32
    %c0_i32_1 = arith.constant 0 : i32
    return %c0_i32, %c0_i32_0 : i32, i32
  }
  func.func @transform_4(%arg0: i32) -> (i32, i32) {
    %c0_i32 = arith.constant 0 : i32
    %c0_i32_0 = arith.constant 0 : i32
    %c0_i32_1 = arith.constant 0 : i32
    return %c0_i32, %c0_i32_0 : i32, i32
  }
  func.func @transform_5(%arg0: i32) -> (i32, i32) {
    %c0_i32 = arith.constant 0 : i32
    %c0_i32_0 = arith.constant 0 : i32
    %c0_i32_1 = arith.constant 0 : i32
    return %c0_i32, %c0_i32_0 : i32, i32
  }
  func.func @transform_6(%arg0: i32) -> (i32, i32) {
    %c0_i32 = arith.constant 0 : i32
    %c0_i32_0 = arith.constant 0 : i32
    %c0_i32_1 = arith.constant 0 : i32
    return %c0_i32, %c0_i32_0 : i32, i32
  }
  func.func @transform_7(%arg0: i32) -> (i32, i32) {
    %c0_i32 = arith.constant 0 : i32
    %c0_i32_0 = arith.constant 0 : i32
    %c0_i32_1 = arith.constant 0 : i32
    return %c0_i32, %c0_i32_0 : i32, i32
  }
  func.func @transform_8(%arg0: i32) -> i32 {
    %c0_i32 = arith.constant 0 : i32
    %c0_i32_0 = arith.constant 0 : i32
    return %c0_i32 : i32
  }
  func.func @transform_9(%arg0: i32) -> i32 {
    %c0_i32 = arith.constant 0 : i32
    %c0_i32_0 = arith.constant 0 : i32
    return %c0_i32 : i32
  }
  func.func @transform_10(%arg0: i32) -> (i32, i32) {
    %c0_i32 = arith.constant 0 : i32
    %c0_i32_0 = arith.constant 0 : i32
    %c0_i32_1 = arith.constant 0 : i32
    return %c0_i32, %c0_i32_0 : i32, i32
  }
}

</mosaic_0001>

<llo_original>
// kernel: tpu_custom_call.1
$region0: #{tpu_custom_call.1}
  #allocation0 [shape = 'u32[]', space=smem, size = 0x4, offset = 0x4, fixed_abs, tag = 'smem constant byte address 0x4 - core index']
  #allocation1 [shape = 'u32[144,128]{1,0:T(1,128)}', space=vmem, size = 0x12000, scoped, tag = 'internal scratch']
  #allocation2 [shape = 's32[1]{0:T(128)S(6)}', space=smem, size = 0x200, scoped, tag = 'scoped memory for tpu_custom_call.1']
  #allocation3 [shape = 'f32[1]{0:T(128)S(6)}', space=smem, size = 0x200, scoped, tag = 'scoped memory for tpu_custom_call.1']
  %s0 = inlined_call_operand.vmem [shape: bf16[32,128], index: 0, kind: input, shape index: {}]
  %s1 = inlined_call_operand.vmem [shape: bf16[32,128], index: 1, kind: input, shape index: {}]
  %s2 = inlined_call_operand.vmem [shape: f32[32,1], index: 2, kind: input, shape index: {}]
  %s3 = inlined_call_operand.hbm [shape: bf16[128,128], index: 3, kind: input, shape index: {}]
  %s4 = inlined_call_operand.vmem [shape: f32[1,128], index: 4, kind: input, shape index: {}]
  %s5 = inlined_call_operand.hbm [shape: bf16[128,128], index: 5, kind: input, shape index: {}]
  %s6 = inlined_call_operand.vmem [shape: f32[1,128], index: 6, kind: input, shape index: {}]
  %s7 = inlined_call_operand.vmem [shape: f32[1,128], index: 7, kind: input, shape index: {}]
  %s8 = inlined_call_operand.<no memory space> [shape: s32[1], index: 8, kind: input, shape index: {}]
  %s9 = inlined_call_operand.<no memory space> [shape: f32[1], index: 9, kind: input, shape index: {}]
  %s10 = inlined_call_operand.hbm [shape: f32[1,1], index: 10, kind: output, shape index: {}]
  %s11 = sld [smem:[#allocation0]]
  $region85: #{tpu_custom_call.1} parent=0
    _
  %s13 = ssub.s32 1, %s11
  %s14 = scalar_select 0, %s13, %s11
  %15 = sst [smem:[#allocation2]] %s8
  %16 = sst [smem:[#allocation3]] %s9
  $region1: #{tpu_custom_call.1} parent=0
    #allocation4 [shape = 'u8[32768]{0}', space=vmem, size = 0x8000, scoped, tag = 'input window, operand 3, single buffered']
    #allocation5 [shape = 's32[2]{0}', space=sflag, size = 0x8, scoped, tag = 'scoped memory for tpu_custom_call.1']
    #allocation6 [shape = 's32[2]{0}', space=sflag, size = 0x8, scoped, tag = 'scoped memory for tpu_custom_call.1']
    #allocation7 [shape = 'u8[32768]{0}', space=vmem, size = 0x8000, scoped, tag = 'input window, operand 5, single buffered']
    #allocation8 [shape = 's32[1]{0}', space=sflag, size = 0x4, scoped, tag = 'scoped memory for tpu_custom_call.1']
    #allocation9 [shape = 'u8[512]{0}', space=vmem, size = 0x400, scoped, tag = 'output window, operand 0, single buffered']
    %17 = vsyncpa [#allocation5], 0
    %18 = vsyncpa [#allocation8], 0
    %19 = vsyncpa [#allocation6], 0
    loop: start=0, step=1, limit=4
    $region2: #{tpu_custom_call.1} parent=1 // loop_pre_header
      _
    $region3: #{tpu_custom_call.1} parent=1 // loop_header
      %s21 = sphi 0, %s25
      %p22 = scmp.ge.s32.totalorder %s21, 4
      %s31 = sphi 0, %s33
      %s34 = sphi 0, %s31
      %s35 = sphi 0, %s34
      %s51 = sphi 0, %s35
      %s57 = sphi 0, %s59
      %s60 = sphi 0, %s57
      %s61 = sphi 0, %s60
      %s77 = sphi 0, %s61
      %s83 = sphi 0, %s85
      %s86 = sphi 0, %s83
      %s87 = sphi 0, %s86
      %s103 = sphi 0, %s87
      %s107 = sphi 0, %s107
      %s109 = sphi 0, %s107
      %s110 = sphi 0, %s109
      %s124 = sphi 0, %s110
      %s128 = sphi 0, %s128
      %s130 = sphi 0, %s128
      %s131 = sphi 0, %s130
      %s145 = sphi 0, %s131
      %s149 = sphi 0, %s149
      %s151 = sphi 0, %s149
      %s152 = sphi 0, %s151
      %s166 = sphi 0, %s152
      %s170 = sphi 0, %s170
      %s172 = sphi 0, %s170
      %s173 = sphi 0, %s172
      %s187 = sphi 0, %s173
      %s191 = sphi 0, %s191
      %s193 = sphi 0, %s191
      %s194 = sphi 0, %s193
      %s208 = sphi 0, %s194
      %s212 = sphi 0, %s212
      %s214 = sphi 0, %s212
      %s215 = sphi 0, %s214
      %s229 = sphi 0, %s215
      %s233 = sphi 0, %s233
      %s235 = sphi 0, %s233
      %s236 = sphi 0, %s235
      %s250 = sphi 0, %s236
      %s254 = sphi 0, %s254
      %s256 = sphi 0, %s254
      %s257 = sphi 0, %s256
      %s271 = sphi 0, %s257
    $region4: #{tpu_custom_call.1} parent=1 // loop_header_branch
      %24 = sbr.rel (%p22) target = $region8
    $region5: #{tpu_custom_call.1} parent=1 // loop_body
      %s26 = ssub.s32 %s21, 1
      %s27 = ssub.s32 %s21, 2
      %s28 = sadd.s32 %s21, 1
      %s29 = ssub.s32 %s21, %s28
      %p30 = scmp.eq.s32.totalorder %s29, 0
      %s32 = sadd.s32 %s31, 1
      %s33 = scalar_select %p30, %s31, %s32
      %p36 = pneg %p30
      %p37 = scmp.eq.s32.totalorder %s21, 1
      %p38 = por %p36, %p37
      %p39 = scmp.ne.s32.totalorder %s31, %s34
      %p40 = scmp.eq.s32.totalorder %s21, 0
      %p41 = por %p39, %p40
      %p42 = scmp.ne.s32.totalorder %s31, %s34
      %p43 = scmp.eq.s32.totalorder %s26, 1
      %p44 = por %p42, %p43
      %p45 = scmp.ne.s32.totalorder %s34, %s35
      %p46 = scmp.eq.s32.totalorder %s26, 0
      %p47 = por %p45, %p46
      %p48 = scmp.ne.s32.totalorder %s34, %s35
      %p49 = scmp.eq.s32.totalorder %s27, 1
      %p50 = por %p48, %p49
      %p52 = scmp.ne.s32.totalorder %s35, %s51
      %p53 = scmp.eq.s32.totalorder %s27, 0
      %p54 = por %p52, %p53
      %s55 = ssub.s32 %s21, %s28
      %p56 = scmp.eq.s32.totalorder %s55, 0
      %s58 = sadd.s32 %s57, 1
      %s59 = scalar_select %p56, %s57, %s58
      %p62 = pneg %p56
      %p63 = scmp.eq.s32.totalorder %s21, 1
      %p64 = por %p62, %p63
      %p65 = scmp.ne.s32.totalorder %s57, %s60
      %p66 = scmp.eq.s32.totalorder %s21, 0
      %p67 = por %p65, %p66
      %p68 = scmp.ne.s32.totalorder %s57, %s60
      %p69 = scmp.eq.s32.totalorder %s26, 1
      %p70 = por %p68, %p69
      %p71 = scmp.ne.s32.totalorder %s60, %s61
      %p72 = scmp.eq.s32.totalorder %s26, 0
      %p73 = por %p71, %p72
      %p74 = scmp.ne.s32.totalorder %s60, %s61
      %p75 = scmp.eq.s32.totalorder %s27, 1
      %p76 = por %p74, %p75
      %p78 = scmp.ne.s32.totalorder %s61, %s77
      %p79 = scmp.eq.s32.totalorder %s27, 0
      %p80 = por %p78, %p79
      %s81 = ssub.s32 %s21, %s28
      %p82 = scmp.eq.s32.totalorder %s81, 0
      %s84 = sadd.s32 %s83, 1
      %s85 = scalar_select %p82, %s83, %s84
      %p88 = pneg %p82
      %p89 = scmp.eq.s32.totalorder %s21, 1
      %p90 = por %p88, %p89
      %p91 = scmp.ne.s32.totalorder %s83, %s86
      %p92 = scmp.eq.s32.totalorder %s21, 0
      %p93 = por %p91, %p92
      %p94 = scmp.ne.s32.totalorder %s83, %s86
      %p95 = scmp.eq.s32.totalorder %s26, 1
      %p96 = por %p94, %p95
      %p97 = scmp.ne.s32.totalorder %s86, %s87
      %p98 = scmp.eq.s32.totalorder %s26, 0
      %p99 = por %p97, %p98
      %p100 = scmp.ne.s32.totalorder %s86, %s87
      %p101 = scmp.eq.s32.totalorder %s27, 1
      %p102 = por %p100, %p101
      %p104 = scmp.ne.s32.totalorder %s87, %s103
      %p105 = scmp.eq.s32.totalorder %s27, 0
      %p106 = por %p104, %p105
      %s108 = sadd.s32 %s107, 1
      %p111 = scmp.eq.s32.totalorder %s21, 1
      %p112 = scmp.ne.s32.totalorder %s107, %s109
      %p113 = scmp.eq.s32.totalorder %s21, 0
      %p114 = por %p112, %p113
      %p115 = scmp.ne.s32.totalorder %s107, %s109
      %p116 = scmp.eq.s32.totalorder %s26, 1
      %p117 = por %p115, %p116
      %p118 = scmp.ne.s32.totalorder %s109, %s110
      %p119 = scmp.eq.s32.totalorder %s26, 0
      %p120 = por %p118, %p119
      %p121 = scmp.ne.s32.totalorder %s109, %s110
      %p122 = scmp.eq.s32.totalorder %s27, 1
      %p123 = por %p121, %p122
      %p125 = scmp.ne.s32.totalorder %s110, %s124
      %p126 = scmp.eq.s32.totalorder %s27, 0
      %p127 = por %p125, %p126
      %s129 = sadd.s32 %s128, 1
      %p132 = scmp.eq.s32.totalorder %s21, 1
      %p133 = scmp.ne.s32.totalorder %s128, %s130
      %p134 = scmp.eq.s32.totalorder %s21, 0
      %p135 = por %p133, %p134
      %p136 = scmp.ne.s32.totalorder %s128, %s130
      %p137 = scmp.eq.s32.totalorder %s26, 1
      %p138 = por %p136, %p137
      %p139 = scmp.ne.s32.totalorder %s130, %s131
      %p140 = scmp.eq.s32.totalorder %s26, 0
      %p141 = por %p139, %p140
      %p142 = scmp.ne.s32.totalorder %s130, %s131
      %p143 = scmp.eq.s32.totalorder %s27, 1
      %p144 = por %p142, %p143
      %p146 = scmp.ne.s32.totalorder %s131, %s145
      %p147 = scmp.eq.s32.totalorder %s27, 0
      %p148 = por %p146, %p147
      %s150 = sadd.s32 %s149, 1
      %p153 = scmp.eq.s32.totalorder %s21, 1
      %p154 = scmp.ne.s32.totalorder %s149, %s151
      %p155 = scmp.eq.s32.totalorder %s21, 0
      %p156 = por %p154, %p155
      %p157 = scmp.ne.s32.totalorder %s149, %s151
      %p158 = scmp.eq.s32.totalorder %s26, 1
      %p159 = por %p157, %p158
      %p160 = scmp.ne.s32.totalorder %s151, %s152
      %p161 = scmp.eq.s32.totalorder %s26, 0
      %p162 = por %p160, %p161
      %p163 = scmp.ne.s32.totalorder %s151, %s152
      %p164 = scmp.eq.s32.totalorder %s27, 1
      %p165 = por %p163, %p164
      %p167 = scmp.ne.s32.totalorder %s152, %s166
      %p168 = scmp.eq.s32.totalorder %s27, 0
      %p169 = por %p167, %p168
      %s171 = sadd.s32 %s170, 1
      %p174 = scmp.eq.s32.totalorder %s21, 1
      %p175 = scmp.ne.s32.totalorder %s170, %s172
      %p176 = scmp.eq.s32.totalorder %s21, 0
      %p177 = por %p175, %p176
      %p178 = scmp.ne.s32.totalorder %s170, %s172
      %p179 = scmp.eq.s32.totalorder %s26, 1
      %p180 = por %p178, %p179
      %p181 = scmp.ne.s32.totalorder %s172, %s173
      %p182 = scmp.eq.s32.totalorder %s26, 0
      %p183 = por %p181, %p182
      %p184 = scmp.ne.s32.totalorder %s172, %s173
      %p185 = scmp.eq.s32.totalorder %s27, 1
      %p186 = por %p184, %p185
      %p188 = scmp.ne.s32.totalorder %s173, %s187
      %p189 = scmp.eq.s32.totalorder %s27, 0
      %p190 = por %p188, %p189
      %s192 = sadd.s32 %s191, 1
      %p195 = scmp.eq.s32.totalorder %s21, 1
      %p196 = scmp.ne.s32.totalorder %s191, %s193
      %p197 = scmp.eq.s32.totalorder %s21, 0
      %p198 = por %p196, %p197
      %p199 = scmp.ne.s32.totalorder %s191, %s193
      %p200 = scmp.eq.s32.totalorder %s26, 1
      %p201 = por %p199, %p200
      %p202 = scmp.ne.s32.totalorder %s193, %s194
      %p203 = scmp.eq.s32.totalorder %s26, 0
      %p204 = por %p202, %p203
      %p205 = scmp.ne.s32.totalorder %s193, %s194
      %p206 = scmp.eq.s32.totalorder %s27, 1
      %p207 = por %p205, %p206
      %p209 = scmp.ne.s32.totalorder %s194, %s208
      %p210 = scmp.eq.s32.totalorder %s27, 0
      %p211 = por %p209, %p210
      %s213 = sadd.s32 %s212, 1
      %p216 = scmp.eq.s32.totalorder %s21, 1
      %p217 = scmp.ne.s32.totalorder %s212, %s214
      %p218 = scmp.eq.s32.totalorder %s21, 0
      %p219 = por %p217, %p218
      %p220 = scmp.ne.s32.totalorder %s212, %s214
      %p221 = scmp.eq.s32.totalorder %s26, 1
      %p222 = por %p220, %p221
      %p223 = scmp.ne.s32.totalorder %s214, %s215
      %p224 = scmp.eq.s32.totalorder %s26, 0
      %p225 = por %p223, %p224
      %p226 = scmp.ne.s32.totalorder %s214, %s215
      %p227 = scmp.eq.s32.totalorder %s27, 1
      %p228 = por %p226, %p227
      %p230 = scmp.ne.s32.totalorder %s215, %s229
      %p231 = scmp.eq.s32.totalorder %s27, 0
      %p232 = por %p230, %p231
      %s234 = sadd.s32 %s233, 1
      %p237 = scmp.eq.s32.totalorder %s21, 1
      %p238 = scmp.ne.s32.totalorder %s233, %s235
      %p239 = scmp.eq.s32.totalorder %s21, 0
      %p240 = por %p238, %p239
      %p241 = scmp.ne.s32.totalorder %s233, %s235
      %p242 = scmp.eq.s32.totalorder %s26, 1
      %p243 = por %p241, %p242
      %p244 = scmp.ne.s32.totalorder %s235, %s236
      %p245 = scmp.eq.s32.totalorder %s26, 0
      %p246 = por %p244, %p245
      %p247 = scmp.ne.s32.totalorder %s235, %s236
      %p248 = scmp.eq.s32.totalorder %s27, 1
      %p249 = por %p247, %p248
      %p251 = scmp.ne.s32.totalorder %s236, %s250
      %p252 = scmp.eq.s32.totalorder %s27, 0
      %p253 = por %p251, %p252
      %s255 = sadd.s32 %s254, 1
      %p258 = scmp.eq.s32.totalorder %s21, 1
      %p259 = scmp.ne.s32.totalorder %s254, %s256
      %p260 = scmp.eq.s32.totalorder %s21, 0
      %p261 = por %p259, %p260
      %p262 = scmp.ne.s32.totalorder %s254, %s256
      %p263 = scmp.eq.s32.totalorder %s26, 1
      %p264 = por %p262, %p263
      %p265 = scmp.ne.s32.totalorder %s256, %s257
      %p266 = scmp.eq.s32.totalorder %s26, 0
      %p267 = por %p265, %p266
      %p268 = scmp.ne.s32.totalorder %s256, %s257
      %p269 = scmp.eq.s32.totalorder %s27, 1
      %p270 = por %p268, %p269
      %p272 = scmp.ne.s32.totalorder %s257, %s271
      %p273 = scmp.eq.s32.totalorder %s27, 0
      %p274 = por %p272, %p273
      %p275 = scmp.le.s32.totalorder 1, %s21
      %p276 = scmp.lt.s32.totalorder %s21, 3
      %p277 = pnand %p275, %p276
      %p278 = pneg %p277
      // Predicated region
      $region9: #{tpu_custom_call.1} parent=5 // pred_check
        _
      $region10: #{tpu_custom_call.1} parent=5 // pred_check_branch
        %280 = sbr.rel (%p277) target = $region12
      $region11: #{tpu_custom_call.1} parent=5 // pred_region
        %s281 = ssub.s32 %s21, 1
        // Predicated region
        $region13: #{tpu_custom_call.1} parent=11 // pred_check
          %p282 = pneg %p120
        $region14: #{tpu_custom_call.1} parent=11 // pred_check_branch
          %284 = sbr.rel (%p282) target = $region16
        $region15: #{tpu_custom_call.1} parent=11 // pred_region
          %s286 = ssub.s32 1024, 1024
          %287 = vsyncadd [#allocation5], %s286
          %s288 = sshll.u32 [#allocation4], 4
          %s289 = int_to_ptr.vmem [resolvable:$true] %s288
          %294 = dma.hbm_to_vmem [thread:$0]  %s3, 1024, %s289, [#allocation5], 64, 64, 4
        $region16: #{tpu_custom_call.1} parent=11 // pred_fallthru
          _
        // Predicated region
        $region17: #{tpu_custom_call.1} parent=11 // pred_check
          %p295 = pneg %p141
        $region18: #{tpu_custom_call.1} parent=11 // pred_check_branch
          %297 = sbr.rel (%p295) target = $region20
        $region19: #{tpu_custom_call.1} parent=11 // pred_region
          _
        $region20: #{tpu_custom_call.1} parent=11 // pred_fallthru
          _
        // Predicated region
        $region21: #{tpu_custom_call.1} parent=11 // pred_check
          %p298 = pneg %p162
        $region22: #{tpu_custom_call.1} parent=11 // pred_check_branch
          %300 = sbr.rel (%p298) target = $region24
        $region23: #{tpu_custom_call.1} parent=11 // pred_region
          %s302 = ssub.s32 1024, 1024
          %303 = vsyncadd [#allocation8], %s302
          %s304 = sshll.u32 [#allocation7], 4
          %s305 = int_to_ptr.vmem [resolvable:$true] %s304
          %310 = dma.hbm_to_vmem [thread:$0]  %s5, 1024, %s305, [#allocation8], 64, 64, 4
        $region24: #{tpu_custom_call.1} parent=11 // pred_fallthru
          _
        // Predicated region
        $region25: #{tpu_custom_call.1} parent=11 // pred_check
          %p311 = pneg %p183
        $region26: #{tpu_custom_call.1} parent=11 // pred_check_branch
          %313 = sbr.rel (%p311) target = $region28
        $region27: #{tpu_custom_call.1} parent=11 // pred_region
          _
        $region28: #{tpu_custom_call.1} parent=11 // pred_fallthru
          _
        // Predicated region
        $region29: #{tpu_custom_call.1} parent=11 // pred_check
          %p314 = pneg %p204
        $region30: #{tpu_custom_call.1} parent=11 // pred_check_branch
          %316 = sbr.rel (%p314) target = $region32
        $region31: #{tpu_custom_call.1} parent=11 // pred_region
          _
        $region32: #{tpu_custom_call.1} parent=11 // pred_fallthru
          _
        // Predicated region
        $region33: #{tpu_custom_call.1} parent=11 // pred_check
          %p317 = pneg %p225
        $region34: #{tpu_custom_call.1} parent=11 // pred_check_branch
          %319 = sbr.rel (%p317) target = $region36
        $region35: #{tpu_custom_call.1} parent=11 // pred_region
          _
        $region36: #{tpu_custom_call.1} parent=11 // pred_fallthru
          _
        // Predicated region
        $region37: #{tpu_custom_call.1} parent=11 // pred_check
          %p320 = pneg %p246
        $region38: #{tpu_custom_call.1} parent=11 // pred_check_branch
          %322 = sbr.rel (%p320) target = $region40
        $region39: #{tpu_custom_call.1} parent=11 // pred_region
          _
        $region40: #{tpu_custom_call.1} parent=11 // pred_fallthru
          _
      $region12: #{tpu_custom_call.1} parent=5 // pred_fallthru
        _
      %p323 = scmp.lt.s32.totalorder %s21, 2
      // Predicated region
      $region41: #{tpu_custom_call.1} parent=5 // pred_check
        %p324 = pneg %p323
      $region42: #{tpu_custom_call.1} parent=5 // pred_check_branch
        %326 = sbr.rel (%p324) target = $region44
      $region43: #{tpu_custom_call.1} parent=5 // pred_region
        // Predicated region
        $region45: #{tpu_custom_call.1} parent=43 // pred_check
          %p327 = pneg %p41
        $region46: #{tpu_custom_call.1} parent=43 // pred_check_branch
          %329 = sbr.rel (%p327) target = $region48
        $region47: #{tpu_custom_call.1} parent=43 // pred_region
          %s330 = smul.u32 2, %s21
          %p331 = scmp.lt.s32.totalorder %s330, 3
          %s332 = scalar_select %p331, %s330, 3
          %s333 = smul.addr %s332, 4
          %s334 = scalar_lea.vmem %s0, %s333
          %s335 = smul.u32 2, %s21
        $region48: #{tpu_custom_call.1} parent=43 // pred_fallthru
          _
        // Predicated region
        $region49: #{tpu_custom_call.1} parent=43 // pred_check
          %p336 = pneg %p67
        $region50: #{tpu_custom_call.1} parent=43 // pred_check_branch
          %338 = sbr.rel (%p336) target = $region52
        $region51: #{tpu_custom_call.1} parent=43 // pred_region
          %s339 = smul.u32 2, %s21
          %p340 = scmp.lt.s32.totalorder %s339, 3
          %s341 = scalar_select %p340, %s339, 3
          %s342 = smul.addr %s341, 4
          %s343 = scalar_lea.vmem %s1, %s342
          %s344 = smul.u32 2, %s21
        $region52: #{tpu_custom_call.1} parent=43 // pred_fallthru
          _
        // Predicated region
        $region53: #{tpu_custom_call.1} parent=43 // pred_check
          %p345 = pneg %p93
        $region54: #{tpu_custom_call.1} parent=43 // pred_check_branch
          %347 = sbr.rel (%p345) target = $region56
        $region55: #{tpu_custom_call.1} parent=43 // pred_region
          %s348 = smul.u32 2, %s21
          %p349 = scmp.lt.s32.totalorder %s348, 3
          %s350 = scalar_select %p349, %s348, 3
          %s351 = smul.addr %s350, 8
          %s352 = scalar_lea.vmem %s2, %s351
          %s353 = smul.u32 2, %s21
        $region56: #{tpu_custom_call.1} parent=43 // pred_fallthru
          _
      $region44: #{tpu_custom_call.1} parent=5 // pred_fallthru
        _
      %p354 = scmp.le.s32.totalorder 1, %s21
      %p355 = scmp.lt.s32.totalorder %s21, 3
      %p356 = pnand %p354, %p355
      %p357 = pneg %p356
      // Predicated region
      $region57: #{tpu_custom_call.1} parent=5 // pred_check
        _
      $region58: #{tpu_custom_call.1} parent=5 // pred_check_branch
        %359 = sbr.rel (%p356) target = $region60
      $region59: #{tpu_custom_call.1} parent=5 // pred_region
        %s360 = ssub.s32 %s21, 1
        // Predicated region
        $region61: #{tpu_custom_call.1} parent=59 // pred_check
          %p361 = pneg %p120
        $region62: #{tpu_custom_call.1} parent=59 // pred_check_branch
          %363 = sbr.rel (%p361) target = $region64
        $region63: #{tpu_custom_call.1} parent=59 // pred_region
          %364 = dma.done [#allocation5], 1024
        $region64: #{tpu_custom_call.1} parent=59 // pred_fallthru
          _
        // Predicated region
        $region65: #{tpu_custom_call.1} parent=59 // pred_check
          %p365 = pneg %p162
        $region66: #{tpu_custom_call.1} parent=59 // pred_check_branch
          %367 = sbr.rel (%p365) target = $region68
        $region67: #{tpu_custom_call.1} parent=59 // pred_region
          %368 = dma.done [#allocation8], 1024
        $region68: #{tpu_custom_call.1} parent=59 // pred_fallthru
          _
        %s369 = smul.u32 2, %s26
        %p370 = scmp.lt.s32.totalorder %s369, 3
        %s371 = scalar_select %p370, %s369, 3
        %s372 = smul.addr %s371, 4
        %s373 = scalar_lea.vmem %s0, %s372
        %p374 = pneg %p47
        %p375 = pneg %p44
        %s376 = smul.u32 2, %s26
        %p377 = scmp.lt.s32.totalorder %s376, 3
        %s378 = scalar_select %p377, %s376, 3
        %s379 = smul.addr %s378, 4
        %s380 = scalar_lea.vmem %s1, %s379
        %p381 = pneg %p73
        %p382 = pneg %p70
        %s383 = smul.u32 2, %s26
        %p384 = scmp.lt.s32.totalorder %s383, 3
        %s385 = scalar_select %p384, %s383, 3
        %s386 = smul.addr %s385, 8
        %s387 = scalar_lea.vmem %s2, %s386
        %p388 = pneg %p99
        %p389 = pneg %p96
        %p390 = pneg %p120
        %p391 = pneg %p117
        %p392 = pneg %p141
        %p393 = pneg %p138
        %p394 = pneg %p162
        %p395 = pneg %p159
        %p396 = pneg %p183
        %p397 = pneg %p180
        %p398 = pneg %p204
        %p399 = pneg %p201
        %p400 = pneg %p225
        %p401 = pneg %p222
        %p402 = pneg %p246
        %p403 = pneg %p243
        %p404 = pneg %p267
        %p405 = pneg %p264
        %s406 = smul.u32 2, %s26
        %p407 = scmp.lt.s32.totalorder %s406, 3
        %s408 = scalar_select %p407, %s406, 3
        %s409 = smul.addr %s408, 4
        %s410 = scalar_lea.vmem %s0, %s409
        %s411 = smul.u32 2, %s26
        %s412 = smul.u32 2, %s26
        %p413 = scmp.lt.s32.totalorder %s412, 3
        %s414 = scalar_select %p413, %s412, 3
        %s415 = smul.addr %s414, 4
        %s416 = scalar_lea.vmem %s1, %s415
        %s417 = smul.u32 2, %s26
        %s418 = smul.u32 2, %s26
        %p419 = scmp.lt.s32.totalorder %s418, 3
        %s420 = scalar_select %p419, %s418, 3
        %s421 = smul.addr %s420, 8
        %s422 = scalar_lea.vmem %s2, %s421
        %s423 = smul.u32 2, %s26
        %p425 = scmp.eq.s32.totalorder %s26, 0
        // Predicated region
        $region69: #{tpu_custom_call.1} parent=59 // pred_check
          %p426 = pneg %p425
        $region70: #{tpu_custom_call.1} parent=59 // pred_check_branch
          %428 = sbr.rel (%p426) target = $region72
        $region71: #{tpu_custom_call.1} parent=59 // pred_region
          %vm429 = vcmask 0
          %430 = vst.msk [vmem:[#allocation9] sm:$0x1] %vm429, 0.0
        $region72: #{tpu_custom_call.1} parent=59 // pred_fallthru
          _
        %v431 = vld [vmem:[#allocation4] sm:$0xf]
        %v432 = vld [vmem:[#allocation4 + $0x4] sm:$0xf]
        %v433 = vld [vmem:[#allocation4 + $0x8] sm:$0xf]
        %v434 = vld [vmem:[#allocation4 + $0xc] sm:$0xf]
        %v435 = vld [vmem:[#allocation4 + $0x10] sm:$0xf]
        %v436 = vld [vmem:[#allocation4 + $0x14] sm:$0xf]
        %v437 = vld [vmem:[#allocation4 + $0x18] sm:$0xf]
        %v438 = vld [vmem:[#allocation4 + $0x1c] sm:$0xf]
        %v439 = vld [vmem:[#allocation4 + $0x20] sm:$0xf]
        %v440 = vld [vmem:[#allocation4 + $0x24] sm:$0xf]
        %v441 = vld [vmem:[#allocation4 + $0x28] sm:$0xf]
        %v442 = vld [vmem:[#allocation4 + $0x2c] sm:$0xf]
        %v443 = vld [vmem:[#allocation4 + $0x30] sm:$0xf]
        %v444 = vld [vmem:[#allocation4 + $0x34] sm:$0xf]
        %v445 = vld [vmem:[#allocation4 + $0x38] sm:$0xf]
        %v446 = vld [vmem:[#allocation4 + $0x3c] sm:$0xf]
        %v447 = vld [vmem:[%s4] sm:$0x1]
        %v448 = vld [vmem:[#allocation7] sm:$0xf]
        %v449 = vld [vmem:[#allocation7 + $0x4] sm:$0xf]
        %v450 = vld [vmem:[#allocation7 + $0x8] sm:$0xf]
        %v451 = vld [vmem:[#allocation7 + $0xc] sm:$0xf]
        %v452 = vld [vmem:[#allocation7 + $0x10] sm:$0xf]
        %v453 = vld [vmem:[#allocation7 + $0x14] sm:$0xf]
        %v454 = vld [vmem:[#allocation7 + $0x18] sm:$0xf]
        %v455 = vld [vmem:[#allocation7 + $0x1c] sm:$0xf]
        %v456 = vld [vmem:[#allocation7 + $0x20] sm:$0xf]
        %v457 = vld [vmem:[#allocation7 + $0x24] sm:$0xf]
        %v458 = vld [vmem:[#allocation7 + $0x28] sm:$0xf]
        %v459 = vld [vmem:[#allocation7 + $0x2c] sm:$0xf]
        %v460 = vld [vmem:[#allocation7 + $0x30] sm:$0xf]
        %v461 = vld [vmem:[#allocation7 + $0x34] sm:$0xf]
        %v462 = vld [vmem:[#allocation7 + $0x38] sm:$0xf]
        %v463 = vld [vmem:[#allocation7 + $0x3c] sm:$0xf]
        %v464 = vld [vmem:[%s6] sm:$0x1]
        %v465 = vld [vmem:[%s7] sm:$0x1]
        %s466 = sld [smem:[#allocation3]]
        %v467 = vld [vmem:[%s410] sm:$0xf]
        %v468 = vld [vmem:[%s410 + $0x4] sm:$0xf]
        %v470 = vlaneseq
        %v471 = vshrl.u32 %v470, 7
        %v472 = vsub.s32 0, %v471
        %v473 = vrot.slane %v447, %v472
        %v477 = vunpack.c.l.b16 %v467
        %v478 = vunpack.c.l.b16 %v468
        %v479 = vpack.c.b16 %v478, %v477
        %v497 = vunpack.c.l.b16 %v431
        %v498 = vunpack.c.l.b16 %v432
        %v499 = vunpack.c.l.b16 %v433
        %v500 = vunpack.c.l.b16 %v434
        %v501 = vunpack.c.l.b16 %v435
        %v502 = vunpack.c.l.b16 %v436
        %v503 = vunpack.c.l.b16 %v437
        %v504 = vunpack.c.l.b16 %v438
        %v505 = vunpack.c.l.b16 %v439
        %v506 = vunpack.c.l.b16 %v440
        %v507 = vunpack.c.l.b16 %v441
        %v508 = vunpack.c.l.b16 %v442
        %v509 = vunpack.c.l.b16 %v443
        %v510 = vunpack.c.l.b16 %v444
        %v511 = vunpack.c.l.b16 %v445
        %v512 = vunpack.c.l.b16 %v446
        %v513 = vpack.c.b16 %v498, %v497
        %v514 = vpack.c.b16 %v500, %v499
        %v515 = vpack.c.b16 %v502, %v501
        %v516 = vpack.c.b16 %v504, %v503
        %v517 = vpack.c.b16 %v506, %v505
        %v518 = vpack.c.b16 %v508, %v507
        %v519 = vpack.c.b16 %v510, %v509
        %v520 = vpack.c.b16 %v512, %v511
        %529 = vmatprep.subr.bf16.mxu0 0
        %530 = vmatpush1.bf16.msra.mxu0 %v513
        %531 = vmatprep.subr.bf16.mxu0 0
        %532 = vmatpush1.bf16.msra.mxu0 %v514
        %533 = vmatprep.subr.bf16.mxu0 0
        %534 = vmatpush1.bf16.msra.mxu0 %v515
        %535 = vmatprep.subr.bf16.mxu0 0
        %536 = vmatpush1.bf16.msra.mxu0 %v516
        %537 = vmatprep.subr.bf16.mxu0 0
        %538 = vmatpush1.bf16.msra.mxu0 %v517
        %539 = vmatprep.subr.bf16.mxu0 0
        %540 = vmatpush1.bf16.msra.mxu0 %v518
        %541 = vmatprep.subr.bf16.mxu0 0
        %542 = vmatpush1.bf16.msra.mxu0 %v519
        %543 = vmatprep.subr.bf16.mxu0 0
        %544 = vmatpush1.bf16.msra.mxu0 %v520
        %545 = vmatprep.subr.bf16.mxu0 0
        %546 = vmatpush1.bf16.msra.mxu0 0
        %547 = vmatprep.subr.bf16.mxu0 0
        %548 = vmatpush1.bf16.msra.mxu0 0
        %549 = vmatprep.subr.bf16.mxu0 0
        %550 = vmatpush1.bf16.msra.mxu0 0
        %551 = vmatprep.subr.bf16.mxu0 0
        %552 = vmatpush1.bf16.msra.mxu0 0
        %553 = vmatprep.subr.bf16.mxu0 0
        %554 = vmatpush1.bf16.msra.mxu0 0
        %555 = vmatprep.subr.bf16.mxu0 0
        %556 = vmatpush1.bf16.msra.mxu0 0
        %557 = vmatprep.subr.bf16.mxu0 0
        %558 = vmatpush1.bf16.msra.mxu0 0
        %559 = vmatprep.subr.bf16.mxu0 0
        %560 = vmatpush1.bf16.msra.mxu0 0
        %561 = vmatprep.mubr.bf16.mxu0 0
        %562 = vmatmul.mubr.bf16.gmra.mrb[0].mxu0 %v479
        %v563 = vpop.f32.mrb[0].mxu0
        %v564 = vadd.f32 %v473, %v563
        %v565 = vpop.f32.mrb[0].mxu0
        %v566 = vpop.f32.mrb[0].mxu0
        %v567 = vadd.f32 %v473, %v566
        %v568 = vpop.f32.mrb[0].mxu0
        %569 = vdwg.mxu0
        %v570 = vmax.f32 %v564, 0.0
        %v571 = vmax.f32 %v567, 0.0
        %v572 = vpack.c.bf16 %v571, %v570
        %v574 = vlaneseq
        %v575 = vshrl.u32 %v574, 7
        %v576 = vsub.s32 0, %v575
        %v577 = vrot.slane %v464, %v576
        %v595 = vunpack.c.l.b16 %v448
        %v596 = vunpack.c.l.b16 %v449
        %v597 = vunpack.c.l.b16 %v450
        %v598 = vunpack.c.l.b16 %v451
        %v599 = vunpack.c.l.b16 %v452
        %v600 = vunpack.c.l.b16 %v453
        %v601 = vunpack.c.l.b16 %v454
        %v602 = vunpack.c.l.b16 %v455
        %v603 = vunpack.c.l.b16 %v456
        %v604 = vunpack.c.l.b16 %v457
        %v605 = vunpack.c.l.b16 %v458
        %v606 = vunpack.c.l.b16 %v459
        %v607 = vunpack.c.l.b16 %v460
        %v608 = vunpack.c.l.b16 %v461
        %v609 = vunpack.c.l.b16 %v462
        %v610 = vunpack.c.l.b16 %v463
        %v611 = vpack.c.b16 %v596, %v595
        %v612 = vpack.c.b16 %v598, %v597
        %v613 = vpack.c.b16 %v600, %v599
        %v614 = vpack.c.b16 %v602, %v601
        %v615 = vpack.c.b16 %v604, %v603
        %v616 = vpack.c.b16 %v606, %v605
        %v617 = vpack.c.b16 %v608, %v607
        %v618 = vpack.c.b16 %v610, %v609
        %627 = vmatprep.subr.bf16.mxu0 0
        %628 = vmatpush1.bf16.msra.mxu0 %v611
        %629 = vmatprep.subr.bf16.mxu0 0
        %630 = vmatpush1.bf16.msra.mxu0 %v612
        %631 = vmatprep.subr.bf16.mxu0 0
        %632 = vmatpush1.bf16.msra.mxu0 %v613
        %633 = vmatprep.subr.bf16.mxu0 0
        %634 = vmatpush1.bf16.msra.mxu0 %v614
        %635 = vmatprep.subr.bf16.mxu0 0
        %636 = vmatpush1.bf16.msra.mxu0 %v615
        %637 = vmatprep.subr.bf16.mxu0 0
        %638 = vmatpush1.bf16.msra.mxu0 %v616
        %639 = vmatprep.subr.bf16.mxu0 0
        %640 = vmatpush1.bf16.msra.mxu0 %v617
        %641 = vmatprep.subr.bf16.mxu0 0
        %642 = vmatpush1.bf16.msra.mxu0 %v618
        %643 = vmatprep.subr.bf16.mxu0 0
        %644 = vmatpush1.bf16.msra.mxu0 0
        %645 = vmatprep.subr.bf16.mxu0 0
        %646 = vmatpush1.bf16.msra.mxu0 0
        %647 = vmatprep.subr.bf16.mxu0 0
        %648 = vmatpush1.bf16.msra.mxu0 0
        %649 = vmatprep.subr.bf16.mxu0 0
        %650 = vmatpush1.bf16.msra.mxu0 0
        %651 = vmatprep.subr.bf16.mxu0 0
        %652 = vmatpush1.bf16.msra.mxu0 0
        %653 = vmatprep.subr.bf16.mxu0 0
        %654 = vmatpush1.bf16.msra.mxu0 0
        %655 = vmatprep.subr.bf16.mxu0 0
        %656 = vmatpush1.bf16.msra.mxu0 0
        %657 = vmatprep.subr.bf16.mxu0 0
        %658 = vmatpush1.bf16.msra.mxu0 0
        %659 = vmatprep.mubr.bf16.mxu0 0
        %660 = vmatmul.mubr.bf16.gmra.mrb[0].mxu0 %v572
        %v661 = vpop.f32.mrb[0].mxu0
        %v662 = vadd.f32 %v577, %v661
        %v663 = vpop.f32.mrb[0].mxu0
        %v664 = vpop.f32.mrb[0].mxu0
        %v665 = vadd.f32 %v577, %v664
        %v666 = vpop.f32.mrb[0].mxu0
        %667 = vdwg.mxu0
        %v668 = vmax.f32 %v662, 0.0
        %v669 = vmax.f32 %v665, 0.0
        %v671 = vlaneseq
        %v672 = vshrl.u32 %v671, 7
        %v673 = vsub.s32 0, %v672
        %v674 = vrot.slane %v465, %v673
        %v676 = vmul.f32 %v668, %v674
        %v677 = vmul.f32 %v669, %v674
        %678 = vadd.xlane.f32.xlu0 %v676
        %v679 = vpop.xlane.xlu0 %678
        %680 = vadd.xlane.f32.xlu0 %v677
        %v681 = vpop.xlane.xlu0 %680
        %v682 = vstv %s466
        %v683 = vadd.f32 %v679, %v682
        %v684 = vadd.f32 %v681, %v682
        %v685 = vld [vmem:[%s416] sm:$0xf]
        %v686 = vld [vmem:[%s416 + $0x4] sm:$0xf]
        %v689 = vunpack.c.l.b16 %v685
        %v690 = vunpack.c.l.b16 %v686
        %v691 = vpack.c.b16 %v690, %v689
        %693 = vmatprep.subr.bf16.mxu0 0
        %694 = vmatpush1.bf16.msra.mxu0 %v513
        %695 = vmatprep.subr.bf16.mxu0 0
        %696 = vmatpush1.bf16.msra.mxu0 %v514
        %697 = vmatprep.subr.bf16.mxu0 0
        %698 = vmatpush1.bf16.msra.mxu0 %v515
        %699 = vmatprep.subr.bf16.mxu0 0
        %700 = vmatpush1.bf16.msra.mxu0 %v516
        %701 = vmatprep.subr.bf16.mxu0 0
        %702 = vmatpush1.bf16.msra.mxu0 %v517
        %703 = vmatprep.subr.bf16.mxu0 0
        %704 = vmatpush1.bf16.msra.mxu0 %v518
        %705 = vmatprep.subr.bf16.mxu0 0
        %706 = vmatpush1.bf16.msra.mxu0 %v519
        %707 = vmatprep.subr.bf16.mxu0 0
        %708 = vmatpush1.bf16.msra.mxu0 %v520
        %709 = vmatprep.subr.bf16.mxu0 0
        %710 = vmatpush1.bf16.msra.mxu0 0
        %711 = vmatprep.subr.bf16.mxu0 0
        %712 = vmatpush1.bf16.msra.mxu0 0
        %713 = vmatprep.subr.bf16.mxu0 0
        %714 = vmatpush1.bf16.msra.mxu0 0
        %715 = vmatprep.subr.bf16.mxu0 0
        %716 = vmatpush1.bf16.msra.mxu0 0
        %717 = vmatprep.subr.bf16.mxu0 0
        %718 = vmatpush1.bf16.msra.mxu0 0
        %719 = vmatprep.subr.bf16.mxu0 0
        %720 = vmatpush1.bf16.msra.mxu0 0
        %721 = vmatprep.subr.bf16.mxu0 0
        %722 = vmatpush1.bf16.msra.mxu0 0
        %723 = vmatprep.subr.bf16.mxu0 0
        %724 = vmatpush1.bf16.msra.mxu0 0
        %725 = vmatprep.mubr.bf16.mxu0 0
        %726 = vmatmul.mubr.bf16.gmra.mrb[0].mxu0 %v691
        %v727 = vpop.f32.mrb[0].mxu0
        %v728 = vadd.f32 %v473, %v727
        %v729 = vpop.f32.mrb[0].mxu0
        %v730 = vpop.f32.mrb[0].mxu0
        %v731 = vadd.f32 %v473, %v730
        %v732 = vpop.f32.mrb[0].mxu0
        %733 = vdwg.mxu0
        %v734 = vmax.f32 %v728, 0.0
        %v735 = vmax.f32 %v731, 0.0
        %v736 = vpack.c.bf16 %v735, %v734
        %737 = vmatprep.subr.bf16.mxu0 0
        %738 = vmatpush1.bf16.msra.mxu0 %v611
        %739 = vmatprep.subr.bf16.mxu0 0
        %740 = vmatpush1.bf16.msra.mxu0 %v612
        %741 = vmatprep.subr.bf16.mxu0 0
        %742 = vmatpush1.bf16.msra.mxu0 %v613
        %743 = vmatprep.subr.bf16.mxu0 0
        %744 = vmatpush1.bf16.msra.mxu0 %v614
        %745 = vmatprep.subr.bf16.mxu0 0
        %746 = vmatpush1.bf16.msra.mxu0 %v615
        %747 = vmatprep.subr.bf16.mxu0 0
        %748 = vmatpush1.bf16.msra.mxu0 %v616
        %749 = vmatprep.subr.bf16.mxu0 0
        %750 = vmatpush1.bf16.msra.mxu0 %v617
        %751 = vmatprep.subr.bf16.mxu0 0
        %752 = vmatpush1.bf16.msra.mxu0 %v618
        %753 = vmatprep.subr.bf16.mxu0 0
        %754 = vmatpush1.bf16.msra.mxu0 0
        %755 = vmatprep.subr.bf16.mxu0 0
        %756 = vmatpush1.bf16.msra.mxu0 0
        %757 = vmatprep.subr.bf16.mxu0 0
        %758 = vmatpush1.bf16.msra.mxu0 0
        %759 = vmatprep.subr.bf16.mxu0 0
        %760 = vmatpush1.bf16.msra.mxu0 0
        %761 = vmatprep.subr.bf16.mxu0 0
        %762 = vmatpush1.bf16.msra.mxu0 0
        %763 = vmatprep.subr.bf16.mxu0 0
        %764 = vmatpush1.bf16.msra.mxu0 0
        %765 = vmatprep.subr.bf16.mxu0 0
        %766 = vmatpush1.bf16.msra.mxu0 0
        %767 = vmatprep.subr.bf16.mxu0 0
        %768 = vmatpush1.bf16.msra.mxu0 0
        %769 = vmatprep.mubr.bf16.mxu0 0
        %770 = vmatmul.mubr.bf16.gmra.mrb[0].mxu0 %v736
        %v771 = vpop.f32.mrb[0].mxu0
        %v772 = vadd.f32 %v577, %v771
        %v773 = vpop.f32.mrb[0].mxu0
        %v774 = vpop.f32.mrb[0].mxu0
        %v775 = vadd.f32 %v577, %v774
        %v776 = vpop.f32.mrb[0].mxu0
        %777 = vdwg.mxu0
        %v778 = vmax.f32 %v772, 0.0
        %v779 = vmax.f32 %v775, 0.0
        %v780 = vmul.f32 %v778, %v674
        %v781 = vmul.f32 %v779, %v674
        %782 = vadd.xlane.f32.xlu0 %v780
        %v783 = vpop.xlane.xlu0 %782
        %784 = vadd.xlane.f32.xlu0 %v781
        %v785 = vpop.xlane.xlu0 %784
        %v786 = vadd.f32 %v783, %v682
        %v787 = vadd.f32 %v785, %v682
        %v788 = vsub.f32 0.0, %v683
        %v789 = vsub.f32 0.0, %v684
        %v790 = vmax.f32 %v788, 0.0
        %v791 = vmax.f32 %v789, 0.0
        %v792 = vand.u32 2147483647, %v788
        %v793 = vand.u32 2147483647, %v789
        %v794 = vsub.f32 0.0, %v792
        %v795 = vsub.f32 0.0, %v793
        %v796 = vmul.f32 %v794, 1.442695
        %v797 = vpow.pop %v796
        %v798 = vmul.f32 %v795, 1.442695
        %v799 = vpow.pop %v798
        %v800 = vadd.f32 %v797, 1.0
        %v801 = vadd.f32 %v799, 1.0
        %v802 = vlog2.pop %v800
        %v803 = vmul.f32 %v802, 0.6931472
        %v804 = vlog2.pop %v801
        %v805 = vmul.f32 %v804, 0.6931472
        %v806 = vadd.f32 %v790, %v803
        %v807 = vadd.f32 %v791, %v805
        %v808 = vld [vmem:[%s422] sm:$0xff]
        %v809 = vld [vmem:[%s422 + $0x8] sm:$0xff]
        %v810 = vmul.f32 %v806, %v808
        %v811 = vmul.f32 %v807, %v809
        %s812 = smul.u32 %s26, 16
        %v813 = vlaneseq
        %v814 = vshrl.u32 %v813, 7
        %v815 = vadd.s32 %v814, 8
        %v816 = vstv %s812
        %v817 = vadd.s32 %v816, %v814
        %v818 = vadd.s32 %v816, %v815
        %v819 = vmax.f32 %v786, 0.0
        %v820 = vmax.f32 %v787, 0.0
        %v821 = vand.u32 2147483647, %v786
        %v822 = vand.u32 2147483647, %v787
        %v823 = vsub.f32 0.0, %v821
        %v824 = vsub.f32 0.0, %v822
        %v825 = vmul.f32 %v823, 1.442695
        %v826 = vpow.pop %v825
        %v827 = vmul.f32 %v824, 1.442695
        %v828 = vpow.pop %v827
        %v829 = vadd.f32 %v826, 1.0
        %v830 = vadd.f32 %v828, 1.0
        %v831 = vlog2.pop %v829
        %v832 = vmul.f32 %v831, 0.6931472
        %v833 = vlog2.pop %v830
        %v834 = vmul.f32 %v833, 0.6931472
        %v835 = vadd.f32 %v819, %v832
        %v836 = vadd.f32 %v820, %v834
        %s837 = sld [smem:[#allocation2]]
        %v838 = vstv %s837
        %vm839 = vcmp.lt.s32.totalorder %v817, %v838
        %vm840 = vcmp.lt.s32.totalorder %v818, %v838
        %v841 = vsel %vm839, 1, 0
        %v842 = vsel %vm840, 1, 0
        %v843 = vcvt.s32.f32 %v841
        %v844 = vcvt.s32.f32 %v842
        %v845 = vmul.f32 %v835, %v843
        %v846 = vmul.f32 %v836, %v844
        %v847 = vld [vmem:[#allocation9] sm:$0x1]
        %v848 = vadd.f32 %v810, %v845
        %v849 = vadd.f32 %v811, %v846
        %vm850 = vcmask 7168
        %v851 = vsel %vm850, %v848, 0.0
        %v852 = vsel %vm850, %v849, 0.0
        %v853 = vadd.f32 %v851, %v852
        %854 = vadd.xlane.f32.xlu0 %v853
        %v855 = vpop.xlane.xlu0 %854
        %v856 = vrot.slane %v855, 4
        %v857 = vadd.f32 %v855, %v856
        %v858 = vrot.slane %v857, 2
        %v859 = vadd.f32 %v857, %v858
        %v860 = vrot.slane %v859, 1
        %v861 = vadd.f32 %v859, %v860
        %s862 = vtos %v861
        %v863 = vstv %s862
        %v864 = vadd.f32 %v847, %v863
        %vm865 = vcmask 0
        %866 = vst.msk [vmem:[#allocation9] sm:$0x1] %vm865, %v864
        // Predicated region
        $region73: #{tpu_custom_call.1} parent=59 // pred_check
          %p867 = pneg %p264
        $region74: #{tpu_custom_call.1} parent=59 // pred_check_branch
          %869 = sbr.rel (%p867) target = $region76
        $region75: #{tpu_custom_call.1} parent=59 // pred_region
          %s871 = ssub.s32 16, 16
          %872 = vsyncadd [#allocation6], %s871
          %s874 = sshll.u32 [#allocation9], 4
          %s875 = int_to_ptr.vmem [resolvable:$true] %s874
          %877 = dma.vmem_to_hbm [thread:$0]  %s875, 16, %s10, [#allocation6]
        $region76: #{tpu_custom_call.1} parent=59 // pred_fallthru
          _
        // Predicated region
        $region77: #{tpu_custom_call.1} parent=59 // pred_check
          %p878 = pneg %p264
        $region78: #{tpu_custom_call.1} parent=59 // pred_check_branch
          %880 = sbr.rel (%p878) target = $region80
        $region79: #{tpu_custom_call.1} parent=59 // pred_region
          %881 = dma.done [#allocation6], 16
        $region80: #{tpu_custom_call.1} parent=59 // pred_fallthru
          _
      $region60: #{tpu_custom_call.1} parent=5 // pred_fallthru
        _
      %p882 = scmp.le.s32.totalorder 2, %s21
      // Predicated region
      $region81: #{tpu_custom_call.1} parent=5 // pred_check
        %p883 = pneg %p882
      $region82: #{tpu_custom_call.1} parent=5 // pred_check_branch
        %885 = sbr.rel (%p883) target = $region84
      $region83: #{tpu_custom_call.1} parent=5 // pred_region
        %s886 = ssub.s32 %s21, 2
      $region84: #{tpu_custom_call.1} parent=5 // pred_fallthru
        _
    $region6: #{tpu_custom_call.1} parent=1 // loop_footer
      %s25 = sadd.s32 1, %s21
    $region7: #{tpu_custom_call.1} parent=1 // loop_footer_branch
      %20 = sbr.rel target = $region3
    $region8: #{tpu_custom_call.1} parent=1 // loop_exit
      _
    %887 = vsyncpa [#allocation5], 1
    %s888 = scalar_lea.sflag [#allocation5], 1
    %889 = vsyncpa %s888, 1
    %890 = vsyncpa [#allocation8], 1
    %891 = vsyncpa [#allocation6], 1
    %s892 = scalar_lea.sflag [#allocation6], 1
    %893 = vsyncpa %s892, 1

</llo_original>
